<compile_context>
chip_gen: v6e
topology: v6e:2x2x1
jax: 0.10.0
libtpu: 0.0.40
codegen_flags: <defaults>
</compile_context>

<pallas_src>
import jax
import jax.numpy as jnp
from jax import lax
from jax.experimental import pallas as pl
from jax.experimental.pallas import tpu as pltpu


def gradient_loss(preds_S, preds_T, label, loss_weight=1.0, ignore_index=255):
    """Pallas implementation of GradientLoss.forward.

    preds_S, preds_T: (N, C, H, W) float (any float dtype; compute is f32)
    label:            (N, H, W) or (N, 1, H, W) int (ignore_index marks invalid)
    """
    # TODO(synk): F.interpolate (bilinear / nearest resize) branches are omitted;
    # preds_S, preds_T and label must share spatial size.
    assert preds_S.shape == preds_T.shape, "resize path not implemented"
    N, C, H, W = preds_T.shape

    if label.ndim == 3:
        label = label[:, None]
    label = label.astype(jnp.int32)
    assert label.shape == (N, 1, H, W)

    def kernel(s_ref, t_ref, l_ref, out_ref):
        x_s = s_ref[0, 0].astype(jnp.float32)          # (H, W)
        x_t = t_ref[0, 0].astype(jnp.float32)          # (H, W)
        mask = (l_ref[0, 0] != ignore_index).astype(jnp.float32)

        zrow = jnp.zeros((1, W), jnp.float32)
        zcol = jnp.zeros((H, 1), jnp.float32)

        # Zero-boundary neighbor shifts (emulate Conv2d zero padding=1).
        def up(v):     # y[h, w] = v[h-1, w]
            return jnp.concatenate([zrow, v[:-1, :]], axis=0)

        def down(v):   # y[h, w] = v[h+1, w]
            return jnp.concatenate([v[1:, :], zrow], axis=0)

        def left(v):   # y[h, w] = v[h, w-1]
            return jnp.concatenate([zcol, v[:, :-1]], axis=1)

        def right(v):  # y[h, w] = v[h, w+1]
            return jnp.concatenate([v[:, 1:], zcol], axis=1)

        def sobel(x):
            # Separable 3x3 Sobel: row-diff D and row-smooth S shared by gx/gy.
            xl, xr = left(x), right(x)
            d = xl - xr                   # [1, 0, -1] along W
            s = xl + 2.0 * x + xr         # [1, 2, 1]  along W
            gx = up(d) + 2.0 * d + down(d)   # [[1,0,-1],[2,0,-2],[1,0,-1]]
            gy = up(s) - down(s)             # [[1,2,1],[0,0,0],[-1,-2,-1]]
            return gx, gy

        sgx, sgy = sobel(x_s)
        tgx, tgy = sobel(x_t)

        s_inv = lax.rsqrt(sgx * sgx + sgy * sgy + 1e-5)
        t_inv = lax.rsqrt(tgx * tgx + tgy * tgy + 1e-5)
        d1 = sgx * s_inv - tgx * t_inv
        d2 = sgy * s_inv - tgy * t_inv

        # Same valid-pixel count for loss1 and loss2 -> one combined sum.
        total = jnp.sum((d1 * d1 + d2 * d2) * mask)
        cnt = jnp.sum(mask)

        # Lane-dense (8,128) output tile: [0,0]=partial loss sum, [0,1]=count.
        ii = lax.broadcasted_iota(jnp.int32, (8, 128), 0)
        jj = lax.broadcasted_iota(jnp.int32, (8, 128), 1)
        tile = jnp.where((ii == 0) & (jj == 0), total,
                         jnp.where((ii == 0) & (jj == 1), cnt, jnp.float32(0.0)))
        out_ref[0, 0] = tile

    parts = pl.pallas_call(
        kernel,
        out_shape=jax.ShapeDtypeStruct((N, C, 8, 128), jnp.float32),
        grid_spec=pltpu.PrefetchScalarGridSpec(
            num_scalar_prefetch=0,
            grid=(N, C),
            in_specs=[
                pl.BlockSpec((1, 1, H, W), lambda n, c: (n, c, 0, 0)),
                pl.BlockSpec((1, 1, H, W), lambda n, c: (n, c, 0, 0)),
                # Label block is constant along the C axis -> stays resident.
                pl.BlockSpec((1, 1, H, W), lambda n, c: (n, 0, 0, 0)),
            ],
            out_specs=pl.BlockSpec((1, 1, 8, 128), lambda n, c: (n, c, 0, 0)),
        ),
        compiler_params=pltpu.CompilerParams(
            dimension_semantics=("parallel", "arbitrary")),
    )(preds_S, preds_T, label)

    total = jnp.sum(parts[:, :, 0, 0])
    count = jnp.sum(parts[:, :, 0, 1])
    # loss1[index].mean() + loss2[index].mean(); if no valid pixels -> 0.
    loss = jnp.where(count > 0.0, total / count, jnp.float32(0.0))
    return jnp.float32(loss_weight) * loss


# ---------------- pure-JAX reference (for correctness check) ----------------
def _ref_gradient_loss(preds_S, preds_T, label, loss_weight=1.0, ignore_index=255):
    kx = jnp.array([[1., 0., -1.], [2., 0., -2.], [1., 0., -1.]], jnp.float32)
    ky = jnp.array([[1., 2., 1.], [0., 0., 0.], [-1., -2., -1.]], jnp.float32)

    def dwconv(x, k):
        xp = jnp.pad(x, ((0, 0), (0, 0), (1, 1), (1, 1)))
        out = jnp.zeros_like(x)
        H, W = x.shape[2], x.shape[3]
        for di in range(3):
            for dj in range(3):
                out = out + k[di, dj] * xp[:, :, di:di + H, dj:dj + W]
        return out

    if label.ndim == 3:
        label = label[:, None]
    index = (label != ignore_index)
    index = jnp.broadcast_to(index, preds_T.shape)

    def norm_grads(x):
        gx = dwconv(x, kx)
        gy = dwconv(x, ky)
        mag = jnp.sqrt(gx * gx + gy * gy + 1e-5)
        return gx / mag, gy / mag

    sgx, sgy = norm_grads(preds_S.astype(jnp.float32))
    tgx, tgy = norm_grads(preds_T.astype(jnp.float32))
    l1 = (sgx - tgx) ** 2
    l2 = (sgy - tgy) ** 2
    cnt = jnp.sum(index.astype(jnp.float32))
    loss = jnp.where(
        cnt > 0,
        jnp.sum(jnp.where(index, l1, 0.0)) / cnt + jnp.sum(jnp.where(index, l2, 0.0)) / cnt,
        0.0)
    return loss_weight * loss


if __name__ == "__main__":
    key = jax.random.PRNGKey(0)
    k1, k2, k3, k4 = jax.random.split(key, 4)

    N, C, H, W = 2, 2, 16, 16  # num_classes=2 as in the module default
    preds_S = jax.random.normal(k1, (N, C, H, W), jnp.float32)
    preds_T = jax.random.normal(k2, (N, C, H, W), jnp.float32)
    # labels in {0, 1}, with ~10% pixels set to ignore_index=255
    label = (jax.random.uniform(k3, (N, H, W)) < 0.5).astype(jnp.int32)
    label = jnp.where(jax.random.uniform(k4, (N, H, W)) < 0.1, 255, label)

    loss = gradient_loss(preds_S, preds_T, label, loss_weight=1.0, ignore_index=255)
    loss = jax.block_until_ready(loss)

    ref = _ref_gradient_loss(preds_S, preds_T, label, loss_weight=1.0, ignore_index=255)
    assert jnp.allclose(loss, ref, rtol=1e-3, atol=1e-4), (loss, ref)

    print("KERNEL_OK")
</pallas_src>

<mosaic_0001>
module attributes {stable_mosaic.version = 11 : i64} {
  func.func @kernel(%arg0: i32, %arg1: i32, %arg2: memref<1x1x16x16xf32, #tpu.memory_space<vmem>>, %arg3: memref<1x1x16x16xf32, #tpu.memory_space<vmem>>, %arg4: memref<1x1x16x16xi32, #tpu.memory_space<vmem>>, %arg5: memref<1x1x8x128xf32, #tpu.memory_space<vmem>>) attributes {dimension_semantics = [#tpu.dimension_semantics<parallel>, #tpu.dimension_semantics<arbitrary>], iteration_bounds = array<i64: 2, 2>, scalar_prefetch = 0 : i64, scratch_operands = 0 : i64, tpu.core_type = #tpu.core_type<tc>, window_params = [{transform_indices = @transform_0, window_bounds = array<i64: 1, 1, 16, 16>}, {transform_indices = @transform_1, window_bounds = array<i64: 1, 1, 16, 16>}, {transform_indices = @transform_2, window_bounds = array<i64: 1, 1, 16, 16>}, {transform_indices = @transform_3, window_bounds = array<i64: 1, 1, 8, 128>}]} {
    %c0 = arith.constant 0 : index
    %c0_0 = arith.constant 0 : index
    %c0_1 = arith.constant 0 : index
    %c0_2 = arith.constant 0 : index
    %0 = vector.load %arg2[%c0, %c0_0, %c0_1, %c0_2] : memref<1x1x16x16xf32, #tpu.memory_space<vmem>>, vector<1x1x16x16xf32>
    %1 = vector.shape_cast %0 : vector<1x1x16x16xf32> to vector<16x16xf32>
    %c0_3 = arith.constant 0 : index
    %c0_4 = arith.constant 0 : index
    %c0_5 = arith.constant 0 : index
    %c0_6 = arith.constant 0 : index
    %2 = vector.load %arg3[%c0_3, %c0_4, %c0_5, %c0_6] : memref<1x1x16x16xf32, #tpu.memory_space<vmem>>, vector<1x1x16x16xf32>
    %3 = vector.shape_cast %2 : vector<1x1x16x16xf32> to vector<16x16xf32>
    %c0_7 = arith.constant 0 : index
    %c0_8 = arith.constant 0 : index
    %c0_9 = arith.constant 0 : index
    %c0_10 = arith.constant 0 : index
    %4 = vector.load %arg4[%c0_7, %c0_8, %c0_9, %c0_10] : memref<1x1x16x16xi32, #tpu.memory_space<vmem>>, vector<1x1x16x16xi32>
    %5 = vector.shape_cast %4 : vector<1x1x16x16xi32> to vector<16x16xi32>
    %c255_i32 = arith.constant 255 : i32
    %6 = vector.broadcast %c255_i32 : i32 to vector<16x16xi32>
    %7 = arith.cmpi ne, %5, %6 : vector<16x16xi32>
    %8 = arith.extui %7 : vector<16x16xi1> to vector<16x16xi32>
    %9 = arith.sitofp %8 : vector<16x16xi32> to vector<16x16xf32>
    %cst = arith.constant 0.000000e+00 : f32
    %10 = vector.broadcast %cst : f32 to vector<1x16xf32>
    %cst_11 = arith.constant 0.000000e+00 : f32
    %11 = vector.broadcast %cst_11 : f32 to vector<16x1xf32>
    %12 = vector.extract_strided_slice %1 {offsets = [0, 0], sizes = [16, 15], strides = [1, 1]} : vector<16x16xf32> to vector<16x15xf32>
    %13 = tpu.concatenate %11, %12 in 1 : vector<16x1xf32>, vector<16x15xf32> -> vector<16x16xf32>
    %14 = vector.extract_strided_slice %1 {offsets = [0, 1], sizes = [16, 15], strides = [1, 1]} : vector<16x16xf32> to vector<16x15xf32>
    %15 = tpu.concatenate %14, %11 in 1 : vector<16x15xf32>, vector<16x1xf32> -> vector<16x16xf32>
    %16 = arith.subf %13, %15 : vector<16x16xf32>
    %cst_12 = arith.constant 2.000000e+00 : f32
    %17 = vector.broadcast %cst_12 : f32 to vector<16x16xf32>
    %18 = arith.mulf %17, %1 : vector<16x16xf32>
    %19 = arith.addf %13, %18 : vector<16x16xf32>
    %20 = arith.addf %19, %15 : vector<16x16xf32>
    %21 = vector.extract_strided_slice %16 {offsets = [0, 0], sizes = [15, 16], strides = [1, 1]} : vector<16x16xf32> to vector<15x16xf32>
    %22 = tpu.concatenate %10, %21 in 0 : vector<1x16xf32>, vector<15x16xf32> -> vector<16x16xf32>
    %cst_13 = arith.constant 2.000000e+00 : f32
    %23 = vector.broadcast %cst_13 : f32 to vector<16x16xf32>
    %24 = arith.mulf %23, %16 : vector<16x16xf32>
    %25 = arith.addf %22, %24 : vector<16x16xf32>
    %26 = vector.extract_strided_slice %16 {offsets = [1, 0], sizes = [15, 16], strides = [1, 1]} : vector<16x16xf32> to vector<15x16xf32>
    %27 = tpu.concatenate %26, %10 in 0 : vector<15x16xf32>, vector<1x16xf32> -> vector<16x16xf32>
    %28 = arith.addf %25, %27 : vector<16x16xf32>
    %29 = vector.extract_strided_slice %20 {offsets = [0, 0], sizes = [15, 16], strides = [1, 1]} : vector<16x16xf32> to vector<15x16xf32>
    %30 = tpu.concatenate %10, %29 in 0 : vector<1x16xf32>, vector<15x16xf32> -> vector<16x16xf32>
    %31 = vector.extract_strided_slice %20 {offsets = [1, 0], sizes = [15, 16], strides = [1, 1]} : vector<16x16xf32> to vector<15x16xf32>
    %32 = tpu.concatenate %31, %10 in 0 : vector<15x16xf32>, vector<1x16xf32> -> vector<16x16xf32>
    %33 = arith.subf %30, %32 : vector<16x16xf32>
    %34 = vector.extract_strided_slice %3 {offsets = [0, 0], sizes = [16, 15], strides = [1, 1]} : vector<16x16xf32> to vector<16x15xf32>
    %35 = tpu.concatenate %11, %34 in 1 : vector<16x1xf32>, vector<16x15xf32> -> vector<16x16xf32>
    %36 = vector.extract_strided_slice %3 {offsets = [0, 1], sizes = [16, 15], strides = [1, 1]} : vector<16x16xf32> to vector<16x15xf32>
    %37 = tpu.concatenate %36, %11 in 1 : vector<16x15xf32>, vector<16x1xf32> -> vector<16x16xf32>
    %38 = arith.subf %35, %37 : vector<16x16xf32>
    %cst_14 = arith.constant 2.000000e+00 : f32
    %39 = vector.broadcast %cst_14 : f32 to vector<16x16xf32>
    %40 = arith.mulf %39, %3 : vector<16x16xf32>
    %41 = arith.addf %35, %40 : vector<16x16xf32>
    %42 = arith.addf %41, %37 : vector<16x16xf32>
    %43 = vector.extract_strided_slice %38 {offsets = [0, 0], sizes = [15, 16], strides = [1, 1]} : vector<16x16xf32> to vector<15x16xf32>
    %44 = tpu.concatenate %10, %43 in 0 : vector<1x16xf32>, vector<15x16xf32> -> vector<16x16xf32>
    %cst_15 = arith.constant 2.000000e+00 : f32
    %45 = vector.broadcast %cst_15 : f32 to vector<16x16xf32>
    %46 = arith.mulf %45, %38 : vector<16x16xf32>
    %47 = arith.addf %44, %46 : vector<16x16xf32>
    %48 = vector.extract_strided_slice %38 {offsets = [1, 0], sizes = [15, 16], strides = [1, 1]} : vector<16x16xf32> to vector<15x16xf32>
    %49 = tpu.concatenate %48, %10 in 0 : vector<15x16xf32>, vector<1x16xf32> -> vector<16x16xf32>
    %50 = arith.addf %47, %49 : vector<16x16xf32>
    %51 = vector.extract_strided_slice %42 {offsets = [0, 0], sizes = [15, 16], strides = [1, 1]} : vector<16x16xf32> to vector<15x16xf32>
    %52 = tpu.concatenate %10, %51 in 0 : vector<1x16xf32>, vector<15x16xf32> -> vector<16x16xf32>
    %53 = vector.extract_strided_slice %42 {offsets = [1, 0], sizes = [15, 16], strides = [1, 1]} : vector<16x16xf32> to vector<15x16xf32>
    %54 = tpu.concatenate %53, %10 in 0 : vector<15x16xf32>, vector<1x16xf32> -> vector<16x16xf32>
    %55 = arith.subf %52, %54 : vector<16x16xf32>
    %56 = arith.mulf %28, %28 : vector<16x16xf32>
    %57 = arith.mulf %33, %33 : vector<16x16xf32>
    %58 = arith.addf %56, %57 : vector<16x16xf32>
    %cst_16 = arith.constant 9.99999974E-6 : f32
    %59 = vector.broadcast %cst_16 : f32 to vector<16x16xf32>
    %60 = arith.addf %58, %59 : vector<16x16xf32>
    %61 = math.rsqrt %60 : vector<16x16xf32>
    %62 = arith.mulf %50, %50 : vector<16x16xf32>
    %63 = arith.mulf %55, %55 : vector<16x16xf32>
    %64 = arith.addf %62, %63 : vector<16x16xf32>
    %cst_17 = arith.constant 9.99999974E-6 : f32
    %65 = vector.broadcast %cst_17 : f32 to vector<16x16xf32>
    %66 = arith.addf %64, %65 : vector<16x16xf32>
    %67 = math.rsqrt %66 : vector<16x16xf32>
    %68 = arith.mulf %28, %61 : vector<16x16xf32>
    %69 = arith.mulf %50, %67 : vector<16x16xf32>
    %70 = arith.subf %68, %69 : vector<16x16xf32>
    %71 = arith.mulf %33, %61 : vector<16x16xf32>
    %72 = arith.mulf %55, %67 : vector<16x16xf32>
    %73 = arith.subf %71, %72 : vector<16x16xf32>
    %74 = arith.mulf %70, %70 : vector<16x16xf32>
    %75 = arith.mulf %73, %73 : vector<16x16xf32>
    %76 = arith.addf %74, %75 : vector<16x16xf32>
    %77 = arith.mulf %76, %9 : vector<16x16xf32>
    %78 = vector.shape_cast %77 : vector<16x16xf32> to vector<1x16x16xf32>
    %cst_18 = arith.constant dense<0.000000e+00> : vector<1xf32>
    %79 = vector.multi_reduction <add>, %78, %cst_18 [1, 2] : vector<1x16x16xf32> to vector<1xf32>
    %80 = vector.shape_cast %79 : vector<1xf32> to vector<1x1x1xf32>
    %81 = vector.extract %80[0, 0, 0] : f32 from vector<1x1x1xf32>
    %82 = vector.shape_cast %9 : vector<16x16xf32> to vector<1x16x16xf32>
    %cst_19 = arith.constant dense<0.000000e+00> : vector<1xf32>
    %83 = vector.multi_reduction <add>, %82, %cst_19 [1, 2] : vector<1x16x16xf32> to vector<1xf32>
    %84 = vector.shape_cast %83 : vector<1xf32> to vector<1x1x1xf32>
    %85 = vector.extract %84[0, 0, 0] : f32 from vector<1x1x1xf32>
    %86 = tpu.iota {dimensions = array<i32: 0>} : vector<8x128xi32>
    %87 = tpu.iota {dimensions = array<i32: 1>} : vector<8x128xi32>
    %c0_i32 = arith.constant 0 : i32
    %88 = vector.broadcast %c0_i32 : i32 to vector<8x128xi32>
    %89 = arith.cmpi eq, %86, %88 : vector<8x128xi32>
    %c0_i32_20 = arith.constant 0 : i32
    %90 = vector.broadcast %c0_i32_20 : i32 to vector<8x128xi32>
    %91 = arith.cmpi eq, %87, %90 : vector<8x128xi32>
    %92 = arith.andi %89, %91 : vector<8x128xi1>
    %c0_i32_21 = arith.constant 0 : i32
    %93 = vector.broadcast %c0_i32_21 : i32 to vector<8x128xi32>
    %94 = arith.cmpi eq, %86, %93 : vector<8x128xi32>
    %c1_i32 = arith.constant 1 : i32
    %95 = vector.broadcast %c1_i32 : i32 to vector<8x128xi32>
    %96 = arith.cmpi eq, %87, %95 : vector<8x128xi32>
    %97 = arith.andi %94, %96 : vector<8x128xi1>
    %cst_22 = arith.constant 0.000000e+00 : f32
    %98 = vector.broadcast %85 : f32 to vector<8x128xf32>
    %99 = vector.broadcast %cst_22 : f32 to vector<8x128xf32>
    %100 = arith.select %97, %98, %99 : vector<8x128xi1>, vector<8x128xf32>
    %101 = vector.broadcast %81 : f32 to vector<8x128xf32>
    %102 = arith.select %92, %101, %100 : vector<8x128xi1>, vector<8x128xf32>
    %c0_23 = arith.constant 0 : index
    %c0_24 = arith.constant 0 : index
    %c0_25 = arith.constant 0 : index
    %c0_26 = arith.constant 0 : index
    %103 = vector.load %arg5[%c0_23, %c0_24, %c0_25, %c0_26] : memref<1x1x8x128xf32, #tpu.memory_space<vmem>>, vector<1x1x8x128xf32>
    %104 = vector.shape_cast %103 : vector<1x1x8x128xf32> to vector<8x128xf32>
    %105 = vector.shape_cast %102 : vector<8x128xf32> to vector<1x1x8x128xf32>
    tpu.vector_store %arg5[%c0_23, %c0_24, %c0_25, %c0_26], %105 {strides = array<i32>} : memref<1x1x8x128xf32, #tpu.memory_space<vmem>>, vector<1x1x8x128xf32>,
    return
  }
  func.func @transform_0(%arg0: i32, %arg1: i32) -> (i32, i32, i32, i32) {
    %c0_i32 = arith.constant 0 : i32
    %c0_i32_0 = arith.constant 0 : i32
    %c0_i32_1 = arith.constant 0 : i32
    return %arg0, %arg1, %c0_i32, %c0_i32_0 : i32, i32, i32, i32
  }
  func.func @transform_1(%arg0: i32, %arg1: i32) -> (i32, i32, i32, i32) {
    %c0_i32 = arith.constant 0 : i32
    %c0_i32_0 = arith.constant 0 : i32
    %c0_i32_1 = arith.constant 0 : i32
    return %arg0, %arg1, %c0_i32, %c0_i32_0 : i32, i32, i32, i32
  }
  func.func @transform_2(%arg0: i32, %arg1: i32) -> (i32, i32, i32, i32) {
    %c0_i32 = arith.constant 0 : i32
    %c0_i32_0 = arith.constant 0 : i32
    %c0_i32_1 = arith.constant 0 : i32
    %c0_i32_2 = arith.constant 0 : i32
    return %arg0, %c0_i32, %c0_i32_0, %c0_i32_1 : i32, i32, i32, i32
  }
  func.func @transform_3(%arg0: i32, %arg1: i32) -> (i32, i32, i32, i32) {
    %c0_i32 = arith.constant 0 : i32
    %c0_i32_0 = arith.constant 0 : i32
    %c0_i32_1 = arith.constant 0 : i32
    return %arg0, %arg1, %c0_i32, %c0_i32_0 : i32, i32, i32, i32
  }
}

</mosaic_0001>

<llo_original>
// kernel: tpu_custom_call.1
$region0: #{tpu_custom_call.1}
  #allocation0 [shape = 'u32[]', space=smem, size = 0x4, offset = 0x4, fixed_abs, tag = 'smem constant byte address 0x4 - core index']
  #allocation1 [shape = 'u32[144,128]{1,0:T(1,128)}', space=vmem, size = 0x12000, scoped, tag = 'internal scratch']
  %s0 = inlined_call_operand.hbm [shape: f32[2,2,16,16], index: 0, kind: input, shape index: {}]
  %s1 = inlined_call_operand.hbm [shape: f32[2,2,16,16], index: 1, kind: input, shape index: {}]
  %s2 = inlined_call_operand.hbm [shape: s32[2,1,16,16], index: 2, kind: input, shape index: {}]
  %s3 = inlined_call_operand.hbm [shape: f32[2,2,8,128], index: 3, kind: output, shape index: {}]
  %s4 = sld [smem:[#allocation0]]
  $region57: #{tpu_custom_call.1} parent=0
    _
  %s6 = ssub.s32 1, %s4
  %s7 = scalar_select 0, %s6, %s4
  $region1: #{tpu_custom_call.1} parent=0
    #allocation2 [shape = 'u8[16384]{0}', space=vmem, size = 0x4000, scoped, tag = 'input window, operand 0']
    #allocation3 [shape = 's32[2]{0}', space=sflag, size = 0x8, scoped, tag = 'scoped memory for tpu_custom_call.1']
    #allocation4 [shape = 's32[2]{0}', space=sflag, size = 0x8, scoped, tag = 'scoped memory for tpu_custom_call.1']
    #allocation5 [shape = 'u8[16384]{0}', space=vmem, size = 0x4000, scoped, tag = 'input window, operand 1']
    #allocation6 [shape = 's32[2]{0}', space=sflag, size = 0x8, scoped, tag = 'scoped memory for tpu_custom_call.1']
    #allocation7 [shape = 'u8[16384]{0}', space=vmem, size = 0x4000, scoped, tag = 'input window, operand 2']
    #allocation8 [shape = 'u8[8192]{0}', space=vmem, size = 0x2000, scoped, tag = 'output window, operand 0']
    %8 = vsyncpa [#allocation3], 0
    %s9 = scalar_lea.sflag [#allocation3], 1
    %10 = vsyncpa %s9, 0
    %11 = vsyncpa [#allocation6], 0
    %s12 = scalar_lea.sflag [#allocation6], 1
    %13 = vsyncpa %s12, 0
    %14 = vsyncpa [#allocation4], 0
    %s15 = scalar_lea.sflag [#allocation4], 1
    %16 = vsyncpa %s15, 0
    loop: start=0, step=1, limit=6
    $region2: #{tpu_custom_call.1} parent=1 // loop_pre_header
      _
    $region3: #{tpu_custom_call.1} parent=1 // loop_header
      %s18 = sphi 0, %s22
      %p19 = scmp.ge.s32.totalorder %s18, 6
      %s25 = sphi 0, %s37
      %s26 = sphi 0, %s33
      %s27 = sphi 0, %s25
      %s28 = sphi 0, %s26
      %s29 = sphi 0, %s27
      %s30 = sphi 0, %s28
      %s42 = sphi 0, %s44
      %s45 = sphi 0, %s42
      %s46 = sphi 0, %s45
      %s62 = sphi 0, %s46
      %s70 = sphi 0, %s72
      %s73 = sphi 0, %s70
      %s74 = sphi 0, %s73
      %s90 = sphi 0, %s74
      %s96 = sphi 0, %s98
      %s99 = sphi 0, %s96
      %s100 = sphi 0, %s99
      %s116 = sphi 0, %s100
      %s124 = sphi 0, %s126
      %s127 = sphi 0, %s124
      %s128 = sphi 0, %s127
      %s144 = sphi 0, %s128
    $region4: #{tpu_custom_call.1} parent=1 // loop_header_branch
      %21 = sbr.rel (%p19) target = $region8
    $region5: #{tpu_custom_call.1} parent=1 // loop_body
      %s23 = ssub.s32 %s18, 1
      %s24 = ssub.s32 %s18, 2
      %s31 = sadd.s32 1, %s26
      %p32 = scmp.ge.s32.totalorder %s31, 2
      %s33 = scalar_select %p32, 0, %s31
      %s34 = sadd.s32 1, %s25
      %s35 = scalar_select %p32, %s34, %s25
      %p36 = scmp.ge.s32.totalorder %s35, 2
      %s37 = scalar_select %p36, 0, %s35
      %s38 = ssub.s32 %s25, %s37
      %s39 = ssub.s32 %s26, %s33
      %s40 = sor.u32 %s38, %s39
      %p41 = scmp.eq.s32.totalorder %s40, 0
      %s43 = sadd.s32 %s42, 1
      %s44 = scalar_select %p41, %s42, %s43
      %p47 = pneg %p41
      %p48 = scmp.eq.s32.totalorder %s18, 3
      %p49 = por %p47, %p48
      %p50 = scmp.ne.s32.totalorder %s42, %s45
      %p51 = scmp.eq.s32.totalorder %s18, 0
      %p52 = por %p50, %p51
      %p53 = scmp.ne.s32.totalorder %s42, %s45
      %p54 = scmp.eq.s32.totalorder %s23, 3
      %p55 = por %p53, %p54
      %p56 = scmp.ne.s32.totalorder %s45, %s46
      %p57 = scmp.eq.s32.totalorder %s23, 0
      %p58 = por %p56, %p57
      %p59 = scmp.ne.s32.totalorder %s45, %s46
      %p60 = scmp.eq.s32.totalorder %s24, 3
      %p61 = por %p59, %p60
      %p63 = scmp.ne.s32.totalorder %s46, %s62
      %p64 = scmp.eq.s32.totalorder %s24, 0
      %p65 = por %p63, %p64
      %s66 = ssub.s32 %s25, %s37
      %s67 = ssub.s32 %s26, %s33
      %s68 = sor.u32 %s66, %s67
      %p69 = scmp.eq.s32.totalorder %s68, 0
      %s71 = sadd.s32 %s70, 1
      %s72 = scalar_select %p69, %s70, %s71
      %p75 = pneg %p69
      %p76 = scmp.eq.s32.totalorder %s18, 3
      %p77 = por %p75, %p76
      %p78 = scmp.ne.s32.totalorder %s70, %s73
      %p79 = scmp.eq.s32.totalorder %s18, 0
      %p80 = por %p78, %p79
      %p81 = scmp.ne.s32.totalorder %s70, %s73
      %p82 = scmp.eq.s32.totalorder %s23, 3
      %p83 = por %p81, %p82
      %p84 = scmp.ne.s32.totalorder %s73, %s74
      %p85 = scmp.eq.s32.totalorder %s23, 0
      %p86 = por %p84, %p85
      %p87 = scmp.ne.s32.totalorder %s73, %s74
      %p88 = scmp.eq.s32.totalorder %s24, 3
      %p89 = por %p87, %p88
      %p91 = scmp.ne.s32.totalorder %s74, %s90
      %p92 = scmp.eq.s32.totalorder %s24, 0
      %p93 = por %p91, %p92
      %s94 = ssub.s32 %s25, %s37
      %p95 = scmp.eq.s32.totalorder %s94, 0
      %s97 = sadd.s32 %s96, 1
      %s98 = scalar_select %p95, %s96, %s97
      %p101 = pneg %p95
      %p102 = scmp.eq.s32.totalorder %s18, 3
      %p103 = por %p101, %p102
      %p104 = scmp.ne.s32.totalorder %s96, %s99
      %p105 = scmp.eq.s32.totalorder %s18, 0
      %p106 = por %p104, %p105
      %p107 = scmp.ne.s32.totalorder %s96, %s99
      %p108 = scmp.eq.s32.totalorder %s23, 3
      %p109 = por %p107, %p108
      %p110 = scmp.ne.s32.totalorder %s99, %s100
      %p111 = scmp.eq.s32.totalorder %s23, 0
      %p112 = por %p110, %p111
      %p113 = scmp.ne.s32.totalorder %s99, %s100
      %p114 = scmp.eq.s32.totalorder %s24, 3
      %p115 = por %p113, %p114
      %p117 = scmp.ne.s32.totalorder %s100, %s116
      %p118 = scmp.eq.s32.totalorder %s24, 0
      %p119 = por %p117, %p118
      %s120 = ssub.s32 %s25, %s37
      %s121 = ssub.s32 %s26, %s33
      %s122 = sor.u32 %s120, %s121
      %p123 = scmp.eq.s32.totalorder %s122, 0
      %s125 = sadd.s32 %s124, 1
      %s126 = scalar_select %p123, %s124, %s125
      %p129 = pneg %p123
      %p130 = scmp.eq.s32.totalorder %s18, 3
      %p131 = por %p129, %p130
      %p132 = scmp.ne.s32.totalorder %s124, %s127
      %p133 = scmp.eq.s32.totalorder %s18, 0
      %p134 = por %p132, %p133
      %p135 = scmp.ne.s32.totalorder %s124, %s127
      %p136 = scmp.eq.s32.totalorder %s23, 3
      %p137 = por %p135, %p136
      %p138 = scmp.ne.s32.totalorder %s127, %s128
      %p139 = scmp.eq.s32.totalorder %s23, 0
      %p140 = por %p138, %p139
      %p141 = scmp.ne.s32.totalorder %s127, %s128
      %p142 = scmp.eq.s32.totalorder %s24, 3
      %p143 = por %p141, %p142
      %p145 = scmp.ne.s32.totalorder %s128, %s144
      %p146 = scmp.eq.s32.totalorder %s24, 0
      %p147 = por %p145, %p146
      %p148 = scmp.le.s32.totalorder 1, %s18
      %p149 = scmp.lt.s32.totalorder %s18, 5
      %p150 = pnand %p148, %p149
      %p151 = pneg %p150
      // Predicated region
      $region9: #{tpu_custom_call.1} parent=5 // pred_check
        _
      $region10: #{tpu_custom_call.1} parent=5 // pred_check_branch
        %153 = sbr.rel (%p150) target = $region12
      $region11: #{tpu_custom_call.1} parent=5 // pred_region
        %s154 = ssub.s32 %s18, 1
      $region12: #{tpu_custom_call.1} parent=5 // pred_fallthru
        _
      %p155 = scmp.lt.s32.totalorder %s18, 4
      // Predicated region
      $region13: #{tpu_custom_call.1} parent=5 // pred_check
        %p156 = pneg %p155
      $region14: #{tpu_custom_call.1} parent=5 // pred_check_branch
        %158 = sbr.rel (%p156) target = $region16
      $region15: #{tpu_custom_call.1} parent=5 // pred_region
        // Predicated region
        $region17: #{tpu_custom_call.1} parent=15 // pred_check
          %p159 = pneg %p52
        $region18: #{tpu_custom_call.1} parent=15 // pred_check_branch
          %161 = sbr.rel (%p159) target = $region20
        $region19: #{tpu_custom_call.1} parent=15 // pred_region
          %s162 = sand.u32 %s42, 1
          %s163 = scalar_lea.sflag [#allocation3], %s162
          %s164 = sand.u32 %s42, 1
          %s165 = smul.addr %s164, 16
          %s166 = scalar_lea.vmem [#allocation2], %s165
          %s168 = ssub.s32 256, 256
          %169 = vsyncadd %s163, %s168
          %s170 = smul.addr %s26, 2
          %s171 = smul.addr %s25, 4
          %s172 = sadd.s32 %s170, %s171
          %s173 = smul.addr %s172, 128
          %s174 = scalar_lea.hbm %s0, %s173
          %s175 = sshll.u32 %s166, 4
          %s176 = int_to_ptr.vmem [resolvable:$true] %s175
          %181 = dma.hbm_to_vmem [thread:$0]  %s174, 256, %s176, %s163, 128, 128, 8
        $region20: #{tpu_custom_call.1} parent=15 // pred_fallthru
          _
        // Predicated region
        $region21: #{tpu_custom_call.1} parent=15 // pred_check
          %p182 = pneg %p80
        $region22: #{tpu_custom_call.1} parent=15 // pred_check_branch
          %184 = sbr.rel (%p182) target = $region24
        $region23: #{tpu_custom_call.1} parent=15 // pred_region
          %s185 = sand.u32 %s18, 1
          %s186 = scalar_lea.sflag [#allocation6], %s185
          %s187 = sand.u32 %s70, 1
          %s188 = smul.addr %s187, 16
          %s189 = scalar_lea.vmem [#allocation5], %s188
          %s191 = ssub.s32 256, 256
          %192 = vsyncadd %s186, %s191
          %s193 = smul.addr %s26, 2
          %s194 = smul.addr %s25, 4
          %s195 = sadd.s32 %s193, %s194
          %s196 = smul.addr %s195, 128
          %s197 = scalar_lea.hbm %s1, %s196
          %s198 = sshll.u32 %s189, 4
          %s199 = int_to_ptr.vmem [resolvable:$true] %s198
          %204 = dma.hbm_to_vmem [thread:$0]  %s197, 256, %s199, %s186, 128, 128, 8
        $region24: #{tpu_custom_call.1} parent=15 // pred_fallthru
          _
        // Predicated region
        $region25: #{tpu_custom_call.1} parent=15 // pred_check
          %p205 = pneg %p106
        $region26: #{tpu_custom_call.1} parent=15 // pred_check_branch
          %207 = sbr.rel (%p205) target = $region28
        $region27: #{tpu_custom_call.1} parent=15 // pred_region
          %s208 = sand.u32 %s18, 1
          %s209 = scalar_lea.sflag [#allocation6], %s208
          %s210 = sand.u32 %s96, 1
          %s211 = smul.addr %s210, 16
          %s212 = scalar_lea.vmem [#allocation7], %s211
          %s214 = ssub.s32 256, 256
          %215 = vsyncadd %s209, %s214
          %s216 = smul.addr %s25, 2
          %s217 = smul.addr %s216, 128
          %s218 = scalar_lea.hbm %s2, %s217
          %s219 = sshll.u32 %s212, 4
          %s220 = int_to_ptr.vmem [resolvable:$true] %s219
          %225 = dma.hbm_to_vmem [thread:$0]  %s218, 256, %s220, %s209, 128, 128, 8
        $region28: #{tpu_custom_call.1} parent=15 // pred_fallthru
          _
      $region16: #{tpu_custom_call.1} parent=5 // pred_fallthru
        _
      %p226 = scmp.le.s32.totalorder 1, %s18
      %p227 = scmp.lt.s32.totalorder %s18, 5
      %p228 = pnand %p226, %p227
      %p229 = pneg %p228
      // Predicated region
      $region29: #{tpu_custom_call.1} parent=5 // pred_check
        _
      $region30: #{tpu_custom_call.1} parent=5 // pred_check_branch
        %231 = sbr.rel (%p228) target = $region32
      $region31: #{tpu_custom_call.1} parent=5 // pred_region
        %s232 = ssub.s32 %s18, 1
        %s233 = sand.u32 %s45, 1
        %s234 = scalar_lea.sflag [#allocation3], %s233
        %s235 = sand.u32 %s45, 1
        %s236 = smul.addr %s235, 16
        %s237 = scalar_lea.vmem [#allocation2], %s236
        // Predicated region
        $region33: #{tpu_custom_call.1} parent=31 // pred_check
          %p238 = pneg %p58
        $region34: #{tpu_custom_call.1} parent=31 // pred_check_branch
          %240 = sbr.rel (%p238) target = $region36
        $region35: #{tpu_custom_call.1} parent=31 // pred_region
          %241 = dma.done %s234, 256
        $region36: #{tpu_custom_call.1} parent=31 // pred_fallthru
          _
        %s242 = sand.u32 %s23, 1
        %s243 = scalar_lea.sflag [#allocation6], %s242
        %s244 = sand.u32 %s73, 1
        %s245 = smul.addr %s244, 16
        %s246 = scalar_lea.vmem [#allocation5], %s245
        // Predicated region
        $region37: #{tpu_custom_call.1} parent=31 // pred_check
          %p247 = pneg %p86
        $region38: #{tpu_custom_call.1} parent=31 // pred_check_branch
          %249 = sbr.rel (%p247) target = $region40
        $region39: #{tpu_custom_call.1} parent=31 // pred_region
          %250 = dma.done %s243, 256
        $region40: #{tpu_custom_call.1} parent=31 // pred_fallthru
          _
        %s251 = sand.u32 %s23, 1
        %s252 = scalar_lea.sflag [#allocation6], %s251
        %s253 = sand.u32 %s99, 1
        %s254 = smul.addr %s253, 16
        %s255 = scalar_lea.vmem [#allocation7], %s254
        // Predicated region
        $region41: #{tpu_custom_call.1} parent=31 // pred_check
          %p256 = pneg %p112
        $region42: #{tpu_custom_call.1} parent=31 // pred_check_branch
          %258 = sbr.rel (%p256) target = $region44
        $region43: #{tpu_custom_call.1} parent=31 // pred_region
          %259 = dma.done %s252, 256
        $region44: #{tpu_custom_call.1} parent=31 // pred_fallthru
          _
        %s260 = sand.u32 %s45, 1
        %s261 = scalar_lea.sflag [#allocation3], %s260
        %s262 = sand.u32 %s45, 1
        %s263 = smul.addr %s262, 16
        %s264 = scalar_lea.vmem [#allocation2], %s263
        %p265 = pneg %p58
        %p266 = pneg %p55
        %s267 = sand.u32 %s23, 1
        %s268 = scalar_lea.sflag [#allocation6], %s267
        %s269 = sand.u32 %s73, 1
        %s270 = smul.addr %s269, 16
        %s271 = scalar_lea.vmem [#allocation5], %s270
        %p272 = pneg %p86
        %p273 = pneg %p83
        %s274 = sand.u32 %s23, 1
        %s275 = scalar_lea.sflag [#allocation6], %s274
        %s276 = sand.u32 %s99, 1
        %s277 = smul.addr %s276, 16
        %s278 = scalar_lea.vmem [#allocation7], %s277
        %p279 = pneg %p112
        %p280 = pneg %p109
        %p281 = pneg %p140
        %p282 = pneg %p137
        %s283 = sand.u32 %s127, 1
        %s284 = scalar_lea.sflag [#allocation4], %s283
        %s285 = sand.u32 %s127, 1
        %s286 = smul.addr %s285, 8
        %s287 = scalar_lea.vmem [#allocation8], %s286
        %v288 = vld [vmem:[%s237] sm:$0xff]
        %v289 = vld [vmem:[%s237 + $0x8] sm:$0xff]
        %v290 = vld [vmem:[%s246] sm:$0xff]
        %v291 = vld [vmem:[%s246 + $0x8] sm:$0xff]
        %v292 = vld [vmem:[%s255] sm:$0xff]
        %v293 = vld [vmem:[%s255 + $0x8] sm:$0xff]
        %vm294 = vcmp.ne.s32.totalorder %v292, 255
        %vm295 = vcmp.ne.s32.totalorder %v293, 255
        %v296 = vsel %vm294, 1, 0
        %v297 = vsel %vm295, 1, 0
        %v298 = vcvt.s32.f32 %v296
        %v299 = vcvt.s32.f32 %v297
        %302 = vrot.lane.b32.xlu0 %v288, 1
        %v303 = vpop.permute.xlu0 %302
        %304 = vrot.lane.b32.xlu0 %v289, 1
        %v305 = vpop.permute.xlu0 %304
        %vm308 = vcmask 7168
        %v309 = vsel %vm308, 0.0, %v303
        %v310 = vsel %vm308, 0.0, %v305
        %311 = vrot.lane.b32.xlu0 %v288, 127
        %v312 = vpop.permute.xlu0 %311
        %313 = vrot.lane.b32.xlu0 %v289, 127
        %v314 = vpop.permute.xlu0 %313
        %vm317 = vcmask 121856
        %v318 = vsel %vm317, %v312, 0.0
        %v319 = vsel %vm317, %v314, 0.0
        %v320 = vsub.f32 %v309, %v318
        %v321 = vsub.f32 %v310, %v319
        %v322 = vmul.f32 %v288, 2.0
        %v323 = vmul.f32 %v289, 2.0
        %v324 = vadd.f32 %v309, %v322
        %v325 = vadd.f32 %v310, %v323
        %v326 = vadd.f32 %v324, %v318
        %v327 = vadd.f32 %v325, %v319
        %vm330 = vcmask 1040384
        %v331 = vrot.slane %v320, 7
        %v332 = vrot.slane %v321, 7
        %v333 = vsel %vm330, %v331, %v332
        %v336 = vsel %vm330, 0.0, %v331
        %v337 = vmul.f32 %v320, 2.0
        %v338 = vmul.f32 %v321, 2.0
        %v339 = vadd.f32 %v336, %v337
        %v340 = vadd.f32 %v333, %v338
        %vm341 = vcmask 1046528
        %v342 = vrot.slane %v320, 1
        %v343 = vrot.slane %v321, 1
        %v344 = vsel %vm341, %v342, %v343
        %v347 = vsel %vm341, %v343, 0.0
        %v348 = vadd.f32 %v339, %v344
        %v349 = vadd.f32 %v340, %v347
        %v352 = vrot.slane %v326, 7
        %v353 = vrot.slane %v327, 7
        %v354 = vsel %vm330, %v352, %v353
        %v357 = vsel %vm330, 0.0, %v352
        %v358 = vrot.slane %v326, 1
        %v359 = vrot.slane %v327, 1
        %v360 = vsel %vm341, %v358, %v359
        %v363 = vsel %vm341, %v359, 0.0
        %v364 = vsub.f32 %v357, %v360
        %v365 = vsub.f32 %v354, %v363
        %368 = vrot.lane.b32.xlu0 %v290, 1
        %v369 = vpop.permute.xlu0 %368
        %370 = vrot.lane.b32.xlu0 %v291, 1
        %v371 = vpop.permute.xlu0 %370
        %v374 = vsel %vm308, 0.0, %v369
        %v375 = vsel %vm308, 0.0, %v371
        %376 = vrot.lane.b32.xlu0 %v290, 127
        %v377 = vpop.permute.xlu0 %376
        %378 = vrot.lane.b32.xlu0 %v291, 127
        %v379 = vpop.permute.xlu0 %378
        %v382 = vsel %vm317, %v377, 0.0
        %v383 = vsel %vm317, %v379, 0.0
        %v384 = vsub.f32 %v374, %v382
        %v385 = vsub.f32 %v375, %v383
        %v386 = vmul.f32 %v290, 2.0
        %v387 = vmul.f32 %v291, 2.0
        %v388 = vadd.f32 %v374, %v386
        %v389 = vadd.f32 %v375, %v387
        %v390 = vadd.f32 %v388, %v382
        %v391 = vadd.f32 %v389, %v383
        %v394 = vrot.slane %v384, 7
        %v395 = vrot.slane %v385, 7
        %v396 = vsel %vm330, %v394, %v395
        %v399 = vsel %vm330, 0.0, %v394
        %v400 = vmul.f32 %v384, 2.0
        %v401 = vmul.f32 %v385, 2.0
        %v402 = vadd.f32 %v399, %v400
        %v403 = vadd.f32 %v396, %v401
        %v404 = vrot.slane %v384, 1
        %v405 = vrot.slane %v385, 1
        %v406 = vsel %vm341, %v404, %v405
        %v409 = vsel %vm341, %v405, 0.0
        %v410 = vadd.f32 %v402, %v406
        %v411 = vadd.f32 %v403, %v409
        %v414 = vrot.slane %v390, 7
        %v415 = vrot.slane %v391, 7
        %v416 = vsel %vm330, %v414, %v415
        %v419 = vsel %vm330, 0.0, %v414
        %v420 = vrot.slane %v390, 1
        %v421 = vrot.slane %v391, 1
        %v422 = vsel %vm341, %v420, %v421
        %v425 = vsel %vm341, %v421, 0.0
        %v426 = vsub.f32 %v419, %v422
        %v427 = vsub.f32 %v416, %v425
        %v428 = vmul.f32 %v348, %v348
        %v429 = vmul.f32 %v349, %v349
        %v430 = vmul.f32 %v364, %v364
        %v431 = vmul.f32 %v365, %v365
        %v432 = vadd.f32 %v428, %v430
        %v433 = vadd.f32 %v429, %v431
        %v434 = vadd.f32 %v432, 1e-05
        %v435 = vadd.f32 %v433, 1e-05
        %v436 = vrsqrt.pop %v434
        %v437 = vrsqrt.pop %v435
        %v438 = vmul.f32 %v410, %v410
        %v439 = vmul.f32 %v411, %v411
        %v440 = vmul.f32 %v426, %v426
        %v441 = vmul.f32 %v427, %v427
        %v442 = vadd.f32 %v438, %v440
        %v443 = vadd.f32 %v439, %v441
        %v444 = vadd.f32 %v442, 1e-05
        %v445 = vadd.f32 %v443, 1e-05
        %v446 = vrsqrt.pop %v444
        %v447 = vrsqrt.pop %v445
        %v448 = vmul.f32 %v348, %v436
        %v449 = vmul.f32 %v349, %v437
        %v450 = vmul.f32 %v410, %v446
        %v451 = vmul.f32 %v411, %v447
        %v452 = vsub.f32 %v448, %v450
        %v453 = vsub.f32 %v449, %v451
        %v454 = vmul.f32 %v364, %v436
        %v455 = vmul.f32 %v365, %v437
        %v456 = vmul.f32 %v426, %v446
        %v457 = vmul.f32 %v427, %v447
        %v458 = vsub.f32 %v454, %v456
        %v459 = vsub.f32 %v455, %v457
        %v460 = vmul.f32 %v452, %v452
        %v461 = vmul.f32 %v453, %v453
        %v462 = vmul.f32 %v458, %v458
        %v463 = vmul.f32 %v459, %v459
        %v464 = vadd.f32 %v460, %v462
        %v465 = vadd.f32 %v461, %v463
        %v466 = vmul.f32 %v464, %v298
        %v467 = vmul.f32 %v465, %v299
        %vm468 = vcmask 130048
        %v469 = vsel %vm468, %v466, 0.0
        %v470 = vsel %vm468, %v467, 0.0
        %v471 = vadd.f32 %v469, %v470
        %472 = vadd.xlane.f32.xlu0 %v471
        %v473 = vpop.xlane.xlu0 %472
        %v474 = vrot.slane %v473, 4
        %v475 = vadd.f32 %v473, %v474
        %v476 = vrot.slane %v475, 2
        %v477 = vadd.f32 %v475, %v476
        %v478 = vrot.slane %v477, 1
        %v479 = vadd.f32 %v477, %v478
        %s480 = vtos %v479
        %v481 = vsel %vm468, %v298, 0.0
        %v482 = vsel %vm468, %v299, 0.0
        %v483 = vadd.f32 %v481, %v482
        %484 = vadd.xlane.f32.xlu0 %v483
        %v485 = vpop.xlane.xlu0 %484
        %v486 = vrot.slane %v485, 4
        %v487 = vadd.f32 %v485, %v486
        %v488 = vrot.slane %v487, 2
        %v489 = vadd.f32 %v487, %v488
        %v490 = vrot.slane %v489, 1
        %v491 = vadd.f32 %v489, %v490
        %s492 = vtos %v491
        %v493 = vlaneseq
        %v494 = vshrl.u32 %v493, 7
        %v495 = vlaneseq
        %v496 = vand.u32 %v495, 127
        %vm497 = vcmp.eq.s32.totalorder %v494, 0
        %vm498 = vcmp.eq.s32.totalorder %v496, 0
        %vm499 = vmand %vm497, %vm498
        %vm500 = vcmp.eq.s32.totalorder %v496, 1
        %vm501 = vmand %vm497, %vm500
        %v502 = vstv %s492
        %v503 = vsel %vm501, %v502, 0.0
        %v504 = vstv %s480
        %v505 = vsel %vm499, %v504, %v503
        %506 = vst [vmem:[%s287] sm:$0xff] %v505
        %s507 = sand.u32 %s127, 1
        %s508 = scalar_lea.sflag [#allocation4], %s507
        %s509 = sand.u32 %s127, 1
        %s510 = smul.addr %s509, 8
        %s511 = scalar_lea.vmem [#allocation8], %s510
        // Predicated region
        $region45: #{tpu_custom_call.1} parent=31 // pred_check
          %p512 = pneg %p137
        $region46: #{tpu_custom_call.1} parent=31 // pred_check_branch
          %514 = sbr.rel (%p512) target = $region48
        $region47: #{tpu_custom_call.1} parent=31 // pred_region
          %s516 = ssub.s32 128, 128
          %517 = vsyncadd %s508, %s516
          %s518 = smul.addr %s27, 2
          %s519 = sadd.s32 %s28, %s518
          %s520 = smul.addr %s519, 128
          %s521 = scalar_lea.hbm %s3, %s520
          %s523 = sshll.u32 %s511, 4
          %s524 = int_to_ptr.vmem [resolvable:$true] %s523
          %526 = dma.vmem_to_hbm [thread:$0]  %s524, 128, %s521, %s508
        $region48: #{tpu_custom_call.1} parent=31 // pred_fallthru
          _
      $region32: #{tpu_custom_call.1} parent=5 // pred_fallthru
        _
      %p527 = scmp.le.s32.totalorder 2, %s18
      // Predicated region
      $region49: #{tpu_custom_call.1} parent=5 // pred_check
        %p528 = pneg %p527
      $region50: #{tpu_custom_call.1} parent=5 // pred_check_branch
        %530 = sbr.rel (%p528) target = $region52
      $region51: #{tpu_custom_call.1} parent=5 // pred_region
        %s531 = ssub.s32 %s18, 2
        // Predicated region
        $region53: #{tpu_custom_call.1} parent=51 // pred_check
          %p532 = pneg %p143
        $region54: #{tpu_custom_call.1} parent=51 // pred_check_branch
          %534 = sbr.rel (%p532) target = $region56
        $region55: #{tpu_custom_call.1} parent=51 // pred_region
          %s535 = sand.u32 %s128, 1
          %s536 = scalar_lea.sflag [#allocation4], %s535
          %s537 = sand.u32 %s128, 1
          %s538 = smul.addr %s537, 8
          %s539 = scalar_lea.vmem [#allocation8], %s538
          %540 = dma.done %s536, 128
        $region56: #{tpu_custom_call.1} parent=51 // pred_fallthru
          _
      $region52: #{tpu_custom_call.1} parent=5 // pred_fallthru
        _
    $region6: #{tpu_custom_call.1} parent=1 // loop_footer
      %s22 = sadd.s32 1, %s18
    $region7: #{tpu_custom_call.1} parent=1 // loop_footer_branch
      %17 = sbr.rel target = $region3
    $region8: #{tpu_custom_call.1} parent=1 // loop_exit
      _
    %541 = vsyncpa [#allocation3], 1
    %s542 = scalar_lea.sflag [#allocation3], 1
    %543 = vsyncpa %s542, 1
    %544 = vsyncpa [#allocation6], 1
    %s545 = scalar_lea.sflag [#allocation6], 1
    %546 = vsyncpa %s545, 1
    %547 = vsyncpa [#allocation4], 1
    %s548 = scalar_lea.sflag [#allocation4], 1
    %549 = vsyncpa %s548, 1

</llo_original>
